<compile_context>
chip_gen: v7x
topology: tpu7x:2x2x1
jax: 0.10.0
libtpu: 0.0.40
codegen_flags: <defaults>
</compile_context>

<pallas_src>
import jax
import jax.numpy as jnp
from jax.experimental import pallas as pl
from jax.experimental.pallas import tpu as pltpu


def _round_up(n, m):
    return ((n + m - 1) // m) * m


def _make_kernel(k1, h2, out_w):
    """Kernel factory; k1/h2/out_w are static layout constants."""
    w2_start = k1
    w2_end = k1 + h2
    b2_row = w2_end

    def kernel(x_ref, p_ref, out_ref):
        x = x_ref[...]                                    # (TB, k1), ones col folded in
        w1 = p_ref[0:k1, :]                               # (k1, 2H) incl. bias row
        # Fused layer 1 for both heads, f32 accumulation on the MXU.
        h = jnp.tanh(jnp.dot(x, w1, preferred_element_type=jnp.float32))
        h = h.astype(p_ref.dtype)
        w2 = p_ref[w2_start:w2_end, 0:out_w]              # (2H, out_w) block-diagonal
        b2 = p_ref[b2_row:b2_row + 1, 0:out_w]            # (1, out_w)
        y = jnp.dot(h, w2, preferred_element_type=jnp.float32) + b2
        out_ref[...] = y.astype(out_ref.dtype)            # lane-dense (TB, out_w) store

    return kernel


def _pack_params(params, s_dim, hidden, a_dim, dtype):
    """Pack all weights/biases into one contiguous (K1 + 2H + 8, 2H) buffer."""
    H = hidden
    H2 = 2 * H
    K1 = _round_up(s_dim + 1, 8)               # + 1 for the ones (bias) column
    OUT_W = _round_up(a_dim + 1, 128)          # lane-dense output width
    assert H2 % 128 == 0 and OUT_W <= H2, "layout assumes 2*hidden >= 128-padded out"

    # Rows [0, K1): layer-1 weights for both heads, bias folded in at row s_dim.
    w1_aug = jnp.zeros((K1, H2), jnp.float32)
    w1_aug = w1_aug.at[:s_dim, :H].set(params["w_pi1"])
    w1_aug = w1_aug.at[:s_dim, H:].set(params["w_v1"])
    w1_aug = w1_aug.at[s_dim, :H].set(params["b_pi1"][0])
    w1_aug = w1_aug.at[s_dim, H:].set(params["b_v1"][0])

    # Rows [K1, K1+2H): block-diagonal layer-2 weights (stored 2H wide; the
    # kernel slices the first OUT_W lanes).
    w2_blk = jnp.zeros((H2, H2), jnp.float32)
    w2_blk = w2_blk.at[:H, :a_dim].set(params["w_pi2"])
    w2_blk = w2_blk.at[H:, a_dim:a_dim + 1].set(params["w_v2"])

    # Rows [K1+2H, K1+2H+8): layer-2 bias in row 0 of the section.
    b2_pad = jnp.zeros((8, H2), jnp.float32)
    b2_pad = b2_pad.at[0, :a_dim].set(params["b_pi2"][0])
    b2_pad = b2_pad.at[0, a_dim].set(params["b_v2"][0, 0])

    packed = jnp.concatenate([w1_aug, w2_blk, b2_pad], axis=0).astype(dtype)
    return packed, K1, H2, OUT_W


def net_forward(x, params, *, block_b=512, compute_dtype=jnp.float32):
    """Pallas forward of Net: returns (logits, values).

    x: (B, s_dim) float32; params: W as (in, out), b as (1, out).
    compute_dtype: set jnp.bfloat16 on v6e/v7x for halved DMA bytes + full
    MXU rate (accumulation stays f32).
    """
    B, s_dim = x.shape
    H = params["w_pi1"].shape[1]
    a_dim = params["w_pi2"].shape[1]

    packed, K1, H2, OUT_W = _pack_params(params, s_dim, H, a_dim, compute_dtype)

    # Batch tiling (sublane-aligned). For v7x (64 MiB VMEM) keep block_b in
    # the low thousands; the default 512 is tiny and always safe.
    TB = min(_round_up(block_b, 8), _round_up(B, 8))
    B_pad = _round_up(B, TB)
    n_blocks = B_pad // TB

    # Augmented, padded input: [x | 1 | 0 ...] so the layer-1 bias folds into
    # the single fused matmul. Padded batch rows are all-zero (discarded).
    x_aug = jnp.zeros((B_pad, K1), jnp.float32)
    x_aug = x_aug.at[:B, :s_dim].set(x)
    x_aug = x_aug.at[:B, s_dim].set(1.0)
    x_aug = x_aug.astype(compute_dtype)

    kernel = _make_kernel(K1, H2, OUT_W)

    itemsize = jnp.dtype(compute_dtype).itemsize
    cost = pl.CostEstimate(
        flops=2 * B_pad * (K1 * H2 + H2 * OUT_W),
        transcendentals=B_pad * H2,
        bytes_accessed=(x_aug.size + packed.size) * itemsize + B_pad * OUT_W * 4,
    )

    out = pl.pallas_call(
        kernel,
        out_shape=jax.ShapeDtypeStruct((B_pad, OUT_W), jnp.float32),
        grid=(n_blocks,),
        in_specs=[
            pl.BlockSpec((TB, K1), lambda i: (i, 0)),          # batch-tiled input
            pl.BlockSpec(packed.shape, lambda i: (0, 0)),      # params: one resident block
        ],
        out_specs=pl.BlockSpec((TB, OUT_W), lambda i: (i, 0)), # lane-dense output slab
        compiler_params=pltpu.CompilerParams(
            dimension_semantics=("parallel",),
        ),
        cost_estimate=cost,
    )(x_aug, packed)

    logits = out[:B, :a_dim]
    values = out[:B, a_dim:a_dim + 1]
    return logits, values


def init_params(key, s_dim, a_dim, hidden=128):
    """Deterministic init matching set_init: weight ~ N(0, 0.1), bias = 0."""
    ks = jax.random.split(key, 4)
    std = 0.1
    return {
        "w_pi1": std * jax.random.normal(ks[0], (s_dim, hidden), jnp.float32),
        "b_pi1": jnp.zeros((1, hidden), jnp.float32),
        "w_pi2": std * jax.random.normal(ks[1], (hidden, a_dim), jnp.float32),
        "b_pi2": jnp.zeros((1, a_dim), jnp.float32),
        "w_v1": std * jax.random.normal(ks[2], (s_dim, hidden), jnp.float32),
        "b_v1": jnp.zeros((1, hidden), jnp.float32),
        "w_v2": std * jax.random.normal(ks[3], (hidden, 1), jnp.float32),
        "b_v2": jnp.zeros((1, 1), jnp.float32),
    }


def _reference_forward(x, p):
    pi1 = jnp.tanh(x @ p["w_pi1"] + p["b_pi1"])
    logits = pi1 @ p["w_pi2"] + p["b_pi2"]
    v1 = jnp.tanh(x @ p["w_v1"] + p["b_v1"])
    values = v1 @ p["w_v2"] + p["b_v2"]
    return logits, values


# TODO(synk): choose_action / loss_func (Categorical sampling, log-prob loss)
# are training/sampling utilities outside the forward pass; not kernelized.

if __name__ == "__main__":
    key = jax.random.PRNGKey(0)
    k_x, k_p = jax.random.split(key)

    s_dim, a_dim, batch = 4, 2, 8
    x = jax.random.normal(k_x, (batch, s_dim), jnp.float32)
    params = init_params(k_p, s_dim, a_dim)

    logits, values = net_forward(x, params)
    jax.block_until_ready((logits, values))

    ref_logits, ref_values = _reference_forward(x, params)
    assert logits.shape == (batch, a_dim)
    assert values.shape == (batch, 1)
    assert jnp.allclose(logits, ref_logits, atol=1e-5, rtol=1e-5)
    assert jnp.allclose(values, ref_values, atol=1e-5, rtol=1e-5)

    print("KERNEL_OK")
</pallas_src>

<mosaic_0001>
module attributes {stable_mosaic.version = 11 : i64} {
  func.func @kernel(%arg0: i32, %arg1: memref<8x8xf32, #tpu.memory_space<vmem>>, %arg2: memref<272x256xf32, #tpu.memory_space<vmem>>, %arg3: memref<8x128xf32, #tpu.memory_space<vmem>>) attributes {dimension_semantics = [#tpu.dimension_semantics<parallel>], iteration_bounds = array<i64: 1>, scalar_prefetch = 0 : i64, scratch_operands = 0 : i64, tpu.core_type = #tpu.core_type<tc>, window_params = [{transform_indices = @transform_0, window_bounds = array<i64: 8, 8>}, {pipeline_mode = #tpu.pipeline_mode<synchronous>, transform_indices = @transform_1, window_bounds = array<i64: 272, 256>}, {transform_indices = @transform_2, window_bounds = array<i64: 8, 128>}]} {
    %c0 = arith.constant 0 : index
    %c0_0 = arith.constant 0 : index
    %0 = vector.load %arg1[%c0, %c0_0] : memref<8x8xf32, #tpu.memory_space<vmem>>, vector<8x8xf32>
    %c0_1 = arith.constant 0 : index
    %c0_2 = arith.constant 0 : index
    %1 = vector.load %arg2[%c0_1, %c0_2] : memref<272x256xf32, #tpu.memory_space<vmem>>, vector<8x256xf32>
    %cst = arith.constant dense<0.000000e+00> : vector<8x256xf32>
    %2 = tpu.matmul %0, %1, %cst {dimension_numbers = #tpu.dot_dimension_numbers<[1], [0], [0], [1], [0, 0, 1, 1], [], []>} : vector<8x8xf32>, vector<8x256xf32>, vector<8x256xf32> -> vector<8x256xf32>
    %3 = math.tanh %2 : vector<8x256xf32>
    %c8 = arith.constant 8 : index
    %c0_3 = arith.constant 0 : index
    %4 = vector.load %arg2[%c8, %c0_3] : memref<272x256xf32, #tpu.memory_space<vmem>>, vector<256x128xf32>
    %c264 = arith.constant 264 : index
    %c0_4 = arith.constant 0 : index
    %5 = vector.load %arg2[%c264, %c0_4] : memref<272x256xf32, #tpu.memory_space<vmem>>, vector<1x128xf32>
    %cst_5 = arith.constant dense<0.000000e+00> : vector<8x128xf32>
    %6 = tpu.matmul %3, %4, %cst_5 {dimension_numbers = #tpu.dot_dimension_numbers<[1], [0], [0], [1], [0, 0, 1, 1], [], []>} : vector<8x256xf32>, vector<256x128xf32>, vector<8x128xf32> -> vector<8x128xf32>
    %7 = vector.broadcast %5 : vector<1x128xf32> to vector<8x128xf32>
    %8 = arith.addf %6, %7 : vector<8x128xf32>
    %c0_6 = arith.constant 0 : index
    %c0_7 = arith.constant 0 : index
    %9 = vector.load %arg3[%c0_6, %c0_7] : memref<8x128xf32, #tpu.memory_space<vmem>>, vector<8x128xf32>
    tpu.vector_store %arg3[%c0_6, %c0_7], %8 {strides = array<i32>} : memref<8x128xf32, #tpu.memory_space<vmem>>, vector<8x128xf32>,
    return
  }
  func.func @transform_0(%arg0: i32) -> (i32, i32) {
    %c0_i32 = arith.constant 0 : i32
    %c0_i32_0 = arith.constant 0 : i32
    return %arg0, %c0_i32 : i32, i32
  }
  func.func @transform_1(%arg0: i32) -> (i32, i32) {
    %c0_i32 = arith.constant 0 : i32
    %c0_i32_0 = arith.constant 0 : i32
    %c0_i32_1 = arith.constant 0 : i32
    return %c0_i32, %c0_i32_0 : i32, i32
  }
  func.func @transform_2(%arg0: i32) -> (i32, i32) {
    %c0_i32 = arith.constant 0 : i32
    %c0_i32_0 = arith.constant 0 : i32
    return %arg0, %c0_i32 : i32, i32
  }
}

</mosaic_0001>

<llo_original>
// kernel: tpu_custom_call.1
$region0: #{tpu_custom_call.1}
  #allocation0 [shape = 'u32[]', space=smem, size = 0x4, offset = 0x4, fixed_abs, tag = 'smem constant byte address 0x4 - core index']
  #allocation1 [shape = 'u32[144,128]{1,0:T(1,128)}', space=vmem, size = 0x12000, scoped, tag = 'internal scratch']
  %s0 = inlined_call_operand.hbm [shape: f32[8,8], index: 0, kind: input, shape index: {}]
  %s1 = inlined_call_operand.hbm [shape: f32[272,256], index: 1, kind: input, shape index: {}]
  %s2 = inlined_call_operand.hbm [shape: f32[8,128], index: 2, kind: output, shape index: {}]
  %s3 = sld [smem:[#allocation0]]
  $region26: #{tpu_custom_call.1} parent=0
    _
  %s5 = ssub.s32 1, %s3
  %s6 = scalar_select 0, %s5, %s3
  $region1: #{tpu_custom_call.1} parent=0
    #allocation2 [shape = 'u8[4096]{0}', space=vmem, size = 0x1000, scoped, tag = 'input window, operand 0, single buffered']
    #allocation3 [shape = 's32[1]{0}', space=sflag, size = 0x4, scoped, tag = 'scoped memory for tpu_custom_call.1']
    #allocation4 [shape = 's32[1]{0}', space=sflag, size = 0x4, scoped, tag = 'scoped memory for tpu_custom_call.1']
    #allocation5 [shape = 'u8[278528]{0}', space=vmem, size = 0x44000, scoped, tag = 'input window, operand 1, single buffered']
    #allocation6 [shape = 's32[1]{0}', space=sflag, size = 0x4, scoped, tag = 'scoped memory for tpu_custom_call.1']
    #allocation7 [shape = 'u8[4096]{0}', space=vmem, size = 0x1000, scoped, tag = 'output window, operand 0, single buffered']
    %7 = vsyncpa [#allocation3], 0
    %8 = vsyncpa [#allocation6], 0
    %9 = vsyncpa [#allocation4], 0
    // Predicated region
    $region2: #{tpu_custom_call.1} parent=1 // pred_check
      _
    $region3: #{tpu_custom_call.1} parent=1 // pred_check_branch
      %11 = sbr.rel (0) target = $region5
    $region4: #{tpu_custom_call.1} parent=1 // pred_region
      %s13 = ssub.s32 128, 128
      %14 = vsyncadd [#allocation3], %s13
      %s16 = sshll.u32 [#allocation2], 4
      %s17 = int_to_ptr.vmem [resolvable:$true] %s16
      %19 = dma.hbm_to_vmem [thread:$0]  %s0, 128, %s17, [#allocation3]
    $region5: #{tpu_custom_call.1} parent=1 // pred_fallthru
      _
    // Predicated region
    $region6: #{tpu_custom_call.1} parent=1 // pred_check
      _
    $region7: #{tpu_custom_call.1} parent=1 // pred_check_branch
      %21 = sbr.rel (0) target = $region9
    $region8: #{tpu_custom_call.1} parent=1 // pred_region
      %s23 = ssub.s32 8704, 8704
      %24 = vsyncadd [#allocation6], %s23
      %s25 = sshll.u32 [#allocation5], 4
      %s26 = int_to_ptr.vmem [resolvable:$true] %s25
      %31 = dma.hbm_to_vmem [thread:$0]  %s1, 8704, %s26, [#allocation6], 256, 256, 16
    $region9: #{tpu_custom_call.1} parent=1 // pred_fallthru
      _
    // Predicated region
    $region10: #{tpu_custom_call.1} parent=1 // pred_check
      _
    $region11: #{tpu_custom_call.1} parent=1 // pred_check_branch
      %33 = sbr.rel (0) target = $region13
    $region12: #{tpu_custom_call.1} parent=1 // pred_region
      %34 = dma.done [#allocation3], 128
    $region13: #{tpu_custom_call.1} parent=1 // pred_fallthru
      _
    // Predicated region
    $region14: #{tpu_custom_call.1} parent=1 // pred_check
      _
    $region15: #{tpu_custom_call.1} parent=1 // pred_check_branch
      %36 = sbr.rel (0) target = $region17
    $region16: #{tpu_custom_call.1} parent=1 // pred_region
      %37 = dma.done [#allocation6], 8704
    $region17: #{tpu_custom_call.1} parent=1 // pred_fallthru
      _
    %v38 = vld [vmem:[#allocation2] sm:$0xff]
    %v39 = vld [vmem:[#allocation5] sm:$0xff]
    %v40 = vld [vmem:[#allocation5 + $0x8] sm:$0xff]
    %vm41 = vcmask 64512
    %v43 = vsel %vm41, %v38, 0
    %45 = vmatprep.subr.mxu0 %v40
    %46 = vmatpush1.msra.mxu0 %v39
    %47 = vmatprep.subr.mxu0 0.0
    %48 = vmatpush1.msra.mxu0 0.0
    %49 = vmatprep.subr.mxu0 0.0
    %50 = vmatpush1.msra.mxu0 0.0
    %51 = vmatprep.subr.mxu0 0.0
    %52 = vmatpush1.msra.mxu0 0.0
    %53 = vmatprep.subr.mxu0 0.0
    %54 = vmatpush1.msra.mxu0 0.0
    %55 = vmatprep.subr.mxu0 0.0
    %56 = vmatpush1.msra.mxu0 0.0
    %57 = vmatprep.subr.mxu0 0.0
    %58 = vmatpush1.msra.mxu0 0.0
    %59 = vmatprep.subr.mxu0 0.0
    %60 = vmatpush1.msra.mxu0 0.0
    %61 = vmatprep.subr.mxu0 0.0
    %62 = vmatpush1.msra.mxu0 0.0
    %63 = vmatprep.subr.mxu0 0.0
    %64 = vmatpush1.msra.mxu0 0.0
    %65 = vmatprep.subr.mxu0 0.0
    %66 = vmatpush1.msra.mxu0 0.0
    %67 = vmatprep.subr.mxu0 0.0
    %68 = vmatpush1.msra.mxu0 0.0
    %69 = vmatprep.subr.mxu0 0.0
    %70 = vmatpush1.msra.mxu0 0.0
    %71 = vmatprep.subr.mxu0 0.0
    %72 = vmatpush1.msra.mxu0 0.0
    %73 = vmatprep.subr.mxu0 0.0
    %74 = vmatpush1.msra.mxu0 0.0
    %75 = vmatprep.subr.mxu0 0.0
    %76 = vmatpush1.msra.mxu0 0.0
    %77 = vmatprep.subr.mxu0 0.0
    %78 = vmatpush1.msra.mxu0 0.0
    %79 = vmatprep.subr.mxu0 0.0
    %80 = vmatpush1.msra.mxu0 0.0
    %81 = vmatprep.subr.mxu0 0.0
    %82 = vmatpush1.msra.mxu0 0.0
    %83 = vmatprep.subr.mxu0 0.0
    %84 = vmatpush1.msra.mxu0 0.0
    %85 = vmatprep.subr.mxu0 0.0
    %86 = vmatpush1.msra.mxu0 0.0
    %87 = vmatprep.subr.mxu0 0.0
    %88 = vmatpush1.msra.mxu0 0.0
    %89 = vmatprep.subr.mxu0 0.0
    %90 = vmatpush1.msra.mxu0 0.0
    %91 = vmatprep.subr.mxu0 0.0
    %92 = vmatpush1.msra.mxu0 0.0
    %93 = vmatprep.subr.mxu0 0.0
    %94 = vmatpush1.msra.mxu0 0.0
    %95 = vmatprep.subr.mxu0 0.0
    %96 = vmatpush1.msra.mxu0 0.0
    %97 = vmatprep.subr.mxu0 0.0
    %98 = vmatpush1.msra.mxu0 0.0
    %99 = vmatprep.subr.mxu0 0.0
    %100 = vmatpush1.msra.mxu0 0.0
    %101 = vmatprep.subr.mxu0 0.0
    %102 = vmatpush1.msra.mxu0 0.0
    %103 = vmatprep.subr.mxu0 0.0
    %104 = vmatpush1.msra.mxu0 0.0
    %105 = vmatprep.subr.mxu0 0.0
    %106 = vmatpush1.msra.mxu0 0.0
    %107 = vmatprep.subr.mxu0 0.0
    %108 = vmatpush1.msra.mxu0 0.0
    %109 = vmatprep.mubr.f32.mxu0 0.0
    %110 = vmatmul.mubr.f32.gmra.mrb[0].mxu0 %v43
    %v111 = vpop.f32.mrb[0].mxu0
    %v112 = vadd.f32 0.0, %v111
    %v113 = vpop.f32.mrb[0].mxu0
    %v114 = vadd.f32 0.0, %v113
    %115 = vdwg.mxu0
    %v116 = vtanh.pop %v112
    %v117 = vtanh.pop %v114
    %v118 = vld [vmem:[#allocation5 + $0x10] sm:$0xff]
    %v119 = vld [vmem:[#allocation5 + $0x20] sm:$0xff]
    %v120 = vld [vmem:[#allocation5 + $0x30] sm:$0xff]
    %v121 = vld [vmem:[#allocation5 + $0x40] sm:$0xff]
    %v122 = vld [vmem:[#allocation5 + $0x50] sm:$0xff]
    %v123 = vld [vmem:[#allocation5 + $0x60] sm:$0xff]
    %v124 = vld [vmem:[#allocation5 + $0x70] sm:$0xff]
    %v125 = vld [vmem:[#allocation5 + $0x80] sm:$0xff]
    %v126 = vld [vmem:[#allocation5 + $0x90] sm:$0xff]
    %v127 = vld [vmem:[#allocation5 + $0xa0] sm:$0xff]
    %v128 = vld [vmem:[#allocation5 + $0xb0] sm:$0xff]
    %v129 = vld [vmem:[#allocation5 + $0xc0] sm:$0xff]
    %v130 = vld [vmem:[#allocation5 + $0xd0] sm:$0xff]
    %v131 = vld [vmem:[#allocation5 + $0xe0] sm:$0xff]
    %v132 = vld [vmem:[#allocation5 + $0xf0] sm:$0xff]
    %v133 = vld [vmem:[#allocation5 + $0x100] sm:$0xff]
    %v134 = vld [vmem:[#allocation5 + $0x110] sm:$0xff]
    %v135 = vld [vmem:[#allocation5 + $0x120] sm:$0xff]
    %v136 = vld [vmem:[#allocation5 + $0x130] sm:$0xff]
    %v137 = vld [vmem:[#allocation5 + $0x140] sm:$0xff]
    %v138 = vld [vmem:[#allocation5 + $0x150] sm:$0xff]
    %v139 = vld [vmem:[#allocation5 + $0x160] sm:$0xff]
    %v140 = vld [vmem:[#allocation5 + $0x170] sm:$0xff]
    %v141 = vld [vmem:[#allocation5 + $0x180] sm:$0xff]
    %v142 = vld [vmem:[#allocation5 + $0x190] sm:$0xff]
    %v143 = vld [vmem:[#allocation5 + $0x1a0] sm:$0xff]
    %v144 = vld [vmem:[#allocation5 + $0x1b0] sm:$0xff]
    %v145 = vld [vmem:[#allocation5 + $0x1c0] sm:$0xff]
    %v146 = vld [vmem:[#allocation5 + $0x1d0] sm:$0xff]
    %v147 = vld [vmem:[#allocation5 + $0x1e0] sm:$0xff]
    %v148 = vld [vmem:[#allocation5 + $0x1f0] sm:$0xff]
    %v149 = vld [vmem:[#allocation5 + $0x200] sm:$0xff]
    %v150 = vld [vmem:[#allocation5 + $0x210] ss:$0 sm:$0xff]
    %151 = vmatprep.subr.mxu0 0.0
    %152 = vmatpush1.msra.mxu0 %v118
    %153 = vmatprep.subr.mxu0 0.0
    %154 = vmatpush1.msra.mxu0 %v119
    %155 = vmatprep.subr.mxu0 0.0
    %156 = vmatpush1.msra.mxu0 %v120
    %157 = vmatprep.subr.mxu0 0.0
    %158 = vmatpush1.msra.mxu0 %v121
    %159 = vmatprep.subr.mxu0 0.0
    %160 = vmatpush1.msra.mxu0 %v122
    %161 = vmatprep.subr.mxu0 0.0
    %162 = vmatpush1.msra.mxu0 %v123
    %163 = vmatprep.subr.mxu0 0.0
    %164 = vmatpush1.msra.mxu0 %v124
    %165 = vmatprep.subr.mxu0 0.0
    %166 = vmatpush1.msra.mxu0 %v125
    %167 = vmatprep.subr.mxu0 0.0
    %168 = vmatpush1.msra.mxu0 %v126
    %169 = vmatprep.subr.mxu0 0.0
    %170 = vmatpush1.msra.mxu0 %v127
    %171 = vmatprep.subr.mxu0 0.0
    %172 = vmatpush1.msra.mxu0 %v128
    %173 = vmatprep.subr.mxu0 0.0
    %174 = vmatpush1.msra.mxu0 %v129
    %175 = vmatprep.subr.mxu0 0.0
    %176 = vmatpush1.msra.mxu0 %v130
    %177 = vmatprep.subr.mxu0 0.0
    %178 = vmatpush1.msra.mxu0 %v131
    %179 = vmatprep.subr.mxu0 0.0
    %180 = vmatpush1.msra.mxu0 %v132
    %181 = vmatprep.subr.mxu0 0.0
    %182 = vmatpush1.msra.mxu0 %v133
    %183 = vmatprep.subr.mxu0 0.0
    %184 = vmatpush1.msra.mxu0 %v134
    %185 = vmatprep.subr.mxu0 0.0
    %186 = vmatpush1.msra.mxu0 %v135
    %187 = vmatprep.subr.mxu0 0.0
    %188 = vmatpush1.msra.mxu0 %v136
    %189 = vmatprep.subr.mxu0 0.0
    %190 = vmatpush1.msra.mxu0 %v137
    %191 = vmatprep.subr.mxu0 0.0
    %192 = vmatpush1.msra.mxu0 %v138
    %193 = vmatprep.subr.mxu0 0.0
    %194 = vmatpush1.msra.mxu0 %v139
    %195 = vmatprep.subr.mxu0 0.0
    %196 = vmatpush1.msra.mxu0 %v140
    %197 = vmatprep.subr.mxu0 0.0
    %198 = vmatpush1.msra.mxu0 %v141
    %199 = vmatprep.subr.mxu0 0.0
    %200 = vmatpush1.msra.mxu0 %v142
    %201 = vmatprep.subr.mxu0 0.0
    %202 = vmatpush1.msra.mxu0 %v143
    %203 = vmatprep.subr.mxu0 0.0
    %204 = vmatpush1.msra.mxu0 %v144
    %205 = vmatprep.subr.mxu0 0.0
    %206 = vmatpush1.msra.mxu0 %v145
    %207 = vmatprep.subr.mxu0 0.0
    %208 = vmatpush1.msra.mxu0 %v146
    %209 = vmatprep.subr.mxu0 0.0
    %210 = vmatpush1.msra.mxu0 %v147
    %211 = vmatprep.subr.mxu0 0.0
    %212 = vmatpush1.msra.mxu0 %v148
    %213 = vmatprep.subr.mxu0 0.0
    %214 = vmatpush1.msra.mxu0 %v149
    %215 = vmatprep.mubr.f32.mxu0 %v117
    %216 = vmatmul.mubr.f32.gmra.mrb[0].mxu0 %v116
    %v217 = vpop.f32.mrb[0].mxu0
    %v218 = vadd.f32 %v150, %v217
    %v219 = vpop.f32.mrb[0].mxu0
    %220 = vdwg.mxu0
    %221 = vst [vmem:[#allocation7] sm:$0xff] %v218
    // Predicated region
    $region18: #{tpu_custom_call.1} parent=1 // pred_check
      _
    $region19: #{tpu_custom_call.1} parent=1 // pred_check_branch
      %223 = sbr.rel (0) target = $region21
    $region20: #{tpu_custom_call.1} parent=1 // pred_region
      %s225 = ssub.s32 128, 128
      %226 = vsyncadd [#allocation4], %s225
      %s228 = sshll.u32 [#allocation7], 4
      %s229 = int_to_ptr.vmem [resolvable:$true] %s228
      %231 = dma.vmem_to_hbm [thread:$0]  %s229, 128, %s2, [#allocation4]
    $region21: #{tpu_custom_call.1} parent=1 // pred_fallthru
      _
    // Predicated region
    $region22: #{tpu_custom_call.1} parent=1 // pred_check
      _
    $region23: #{tpu_custom_call.1} parent=1 // pred_check_branch
      %233 = sbr.rel (0) target = $region25
    $region24: #{tpu_custom_call.1} parent=1 // pred_region
      %234 = dma.done [#allocation4], 128
    $region25: #{tpu_custom_call.1} parent=1 // pred_fallthru
      _
    %235 = vsyncpa [#allocation3], 1
    %236 = vsyncpa [#allocation6], 1
    %237 = vsyncpa [#allocation4], 1

</llo_original>
